<compile_context>
chip_gen: v7x
topology: tpu7x:2x2x1
jax: 0.10.0
libtpu: 0.0.40
codegen_flags: <defaults>
</compile_context>

<pallas_src>
import jax
import jax.numpy as jnp
from jax.experimental import pallas as pl
from jax.experimental.pallas import tpu as pltpu

_HIDDEN = 100        # PyTorch hidden width
_HIDDEN_PAD = 128    # padded to one full vreg lane width
_TARGET_TILE_BYTES = 1 << 20   # ~1 MiB of x per grid step
_MAX_BLOCK_B = 8192


def _round_up(x, m):
    return (x + m - 1) // m * m


def _critic_kernel(x_ref, w1_ref, b1_ref, w2_ref, b2_ref, out_ref):
    # fc1 on the MXU, f32 accumulation, full-lane (TB, 128) activation tile.
    h = jnp.dot(x_ref[...], w1_ref[...], preferred_element_type=jnp.float32)
    h = jnp.maximum(h + b1_ref[...], 0.0)                     # bias + ReLU (VPU)
    # state_value (128 -> 1): VPU multiply + cross-lane reduce (XLU) instead of
    # an N=1 MXU matmul; b2 is a scalar read from SMEM.
    v = jnp.sum(h * w2_ref[...], axis=1, keepdims=True) + b2_ref[0]
    out_ref[...] = v.astype(out_ref.dtype)


def critic_forward(x, w1, b1, w2, b2, *, block_b=None):
    """x: (B, num_state) f32, padded params -> value: (B, 1) f32.

    Parameter layout (pre-transposed / padded, see pad_critic_params):
      w1: (num_state, HIDDEN_PAD)   b1: (1, HIDDEN_PAD)
      w2: (1, HIDDEN_PAD)           b2: (1,)
    """
    B, K = x.shape
    Hp = w1.shape[1]

    if block_b is None:
        # Size the batch tile so each x DMA is ~1 MiB of HBM traffic, capped so
        # the lane-padded VMEM double-buffers stay well inside 32 MiB scoped.
        block_b = max(8, min(_MAX_BLOCK_B,
                             _round_up(_TARGET_TILE_BYTES // (K * 4), 8)))
    assert block_b % 8 == 0

    # >= 2 grid steps whenever the batch allows (v7x megacore sharding); tile
    # rows are a multiple of 8 sublanes.  Ragged tails are handled by Pallas
    # partial-block padding/masking (rows are independent, no cross-row ops).
    TB = min(block_b, max(8, _round_up(pl.cdiv(B, 2), 8)))
    nb = pl.cdiv(B, TB)

    flops = 2 * B * K * Hp + 3 * B * Hp
    bytes_accessed = int(x.nbytes + w1.nbytes + b1.nbytes + w2.nbytes
                         + b2.nbytes + B * 4)

    out = pl.pallas_call(
        _critic_kernel,
        out_shape=jax.ShapeDtypeStruct((B, 1), jnp.float32),
        grid=(nb,),
        in_specs=[
            # x streams one (TB, K) tile per grid step (double-buffered DMA).
            pl.BlockSpec((TB, K), lambda i: (i, 0)),
            # Weights/biases: same block every step -> resident in VMEM.
            pl.BlockSpec((K, Hp), lambda i: (0, 0)),
            pl.BlockSpec((1, Hp), lambda i: (0, 0)),
            pl.BlockSpec((1, Hp), lambda i: (0, 0)),
            # Scalar output bias: 1-D (1,) ref in SMEM (4 bytes, no VMEM tile).
            pl.BlockSpec(memory_space=pltpu.MemorySpace.SMEM),
        ],
        out_specs=pl.BlockSpec((TB, 1), lambda i: (i, 0)),
        compiler_params=pltpu.CompilerParams(
            dimension_semantics=("parallel",),
            vmem_limit_bytes=32 * 1024 * 1024),
        cost_estimate=pl.CostEstimate(
            flops=flops, transcendentals=0, bytes_accessed=bytes_accessed),
    )(x, w1, b1, w2, b2)
    return out


def init_critic_params(key, num_state, hidden=_HIDDEN):
    """nn.Linear-style init: U(-1/sqrt(fan_in), 1/sqrt(fan_in)).

    Stored as (in_features, out_features) == W^T relative to PyTorch; the
    second-layer weight is kept as a (1, hidden) row vector, b2 as (1,).
    """
    k1, k2, k3, k4 = jax.random.split(key, 4)
    bound1 = 1.0 / jnp.sqrt(num_state)
    bound2 = 1.0 / jnp.sqrt(hidden)
    w1 = jax.random.uniform(k1, (num_state, hidden), jnp.float32, -bound1, bound1)
    b1 = jax.random.uniform(k2, (1, hidden), jnp.float32, -bound1, bound1)
    w2 = jax.random.uniform(k3, (1, hidden), jnp.float32, -bound2, bound2)
    b2 = jax.random.uniform(k4, (1,), jnp.float32, -bound2, bound2)
    return w1, b1, w2, b2


def pad_critic_params(w1, b1, w2, b2, hidden_pad=_HIDDEN_PAD):
    """Zero-pad hidden dim to a full 128-lane vreg (done once, off the per-call
    path). Padded units are exact no-ops: relu(0 + 0) * 0 == 0."""
    pad = hidden_pad - w1.shape[1]
    w1p = jnp.pad(w1, ((0, 0), (0, pad)))
    b1p = jnp.pad(b1, ((0, 0), (0, pad)))
    w2p = jnp.pad(w2, ((0, 0), (0, pad)))
    return w1p, b1p, w2p, b2


def critic_reference(x, w1, b1, w2, b2):
    """Plain-JAX reference with the original (unpadded) parameters."""
    h = jnp.maximum(x @ w1 + b1, 0.0)
    return jnp.sum(h * w2, axis=-1, keepdims=True) + b2


if __name__ == "__main__":
    num_state = 32
    batch = 8

    key = jax.random.PRNGKey(0)
    kx, kp, kx2 = jax.random.split(key, 3)
    x = jax.random.normal(kx, (batch, num_state), jnp.float32)
    params = init_critic_params(kp, num_state)
    padded = pad_critic_params(*params)

    value = jax.block_until_ready(critic_forward(x, *padded))
    ref = critic_reference(x, *params)
    assert value.shape == (batch, 1)
    assert jnp.allclose(value, ref, atol=1e-5, rtol=1e-5), float(
        jnp.max(jnp.abs(value - ref)))

    # Exercise the multi-step grid with a ragged batch: 2 grid steps, the last
    # block overhangs the array (partial-block read/masked write), weights stay
    # resident across steps, no wrapper-side padding copy of x.
    x2 = jax.random.normal(kx2, (100, num_state), jnp.float32)
    value2 = jax.block_until_ready(critic_forward(x2, *padded, block_b=64))
    ref2 = critic_reference(x2, *params)
    assert value2.shape == (100, 1)
    assert jnp.allclose(value2, ref2, atol=1e-5, rtol=1e-5), float(
        jnp.max(jnp.abs(value2 - ref2)))

    print("KERNEL_OK")
</pallas_src>

<mosaic_0001>
module attributes {stable_mosaic.version = 11 : i64} {
  func.func @_critic_kernel(%arg0: i32, %arg1: memref<8x32xf32, #tpu.memory_space<vmem>>, %arg2: memref<32x128xf32, #tpu.memory_space<vmem>>, %arg3: memref<1x128xf32, #tpu.memory_space<vmem>>, %arg4: memref<1x128xf32, #tpu.memory_space<vmem>>, %arg5: memref<1xf32, #tpu.memory_space<smem>>, %arg6: memref<8x1xf32, #tpu.memory_space<vmem>>) attributes {dimension_semantics = [#tpu.dimension_semantics<parallel>], iteration_bounds = array<i64: 1>, scalar_prefetch = 0 : i64, scratch_operands = 0 : i64, tpu.core_type = #tpu.core_type<tc>, window_params = [{transform_indices = @transform_0, window_bounds = array<i64: 8, 32>}, {pipeline_mode = #tpu.pipeline_mode<synchronous>, transform_indices = @transform_1, window_bounds = array<i64: 32, 128>}, {pipeline_mode = #tpu.pipeline_mode<synchronous>, transform_indices = @transform_2, window_bounds = array<i64: 1, 128>}, {pipeline_mode = #tpu.pipeline_mode<synchronous>, transform_indices = @transform_3, window_bounds = array<i64: 1, 128>}, {transform_indices = @transform_4, window_bounds = array<i64: 1>}, {transform_indices = @transform_5, window_bounds = array<i64: 8, 1>}]} {
    %c0 = arith.constant 0 : index
    %c0_0 = arith.constant 0 : index
    %0 = vector.load %arg1[%c0, %c0_0] : memref<8x32xf32, #tpu.memory_space<vmem>>, vector<8x32xf32>
    %c0_1 = arith.constant 0 : index
    %c0_2 = arith.constant 0 : index
    %1 = vector.load %arg2[%c0_1, %c0_2] : memref<32x128xf32, #tpu.memory_space<vmem>>, vector<32x128xf32>
    %cst = arith.constant dense<0.000000e+00> : vector<8x128xf32>
    %2 = tpu.matmul %0, %1, %cst {dimension_numbers = #tpu.dot_dimension_numbers<[1], [0], [0], [1], [0, 0, 1, 1], [], []>} : vector<8x32xf32>, vector<32x128xf32>, vector<8x128xf32> -> vector<8x128xf32>
    %c0_3 = arith.constant 0 : index
    %c0_4 = arith.constant 0 : index
    %3 = vector.load %arg3[%c0_3, %c0_4] : memref<1x128xf32, #tpu.memory_space<vmem>>, vector<1x128xf32>
    %4 = vector.broadcast %3 : vector<1x128xf32> to vector<8x128xf32>
    %5 = arith.addf %2, %4 : vector<8x128xf32>
    %cst_5 = arith.constant 0.000000e+00 : f32
    %6 = vector.broadcast %cst_5 : f32 to vector<8x128xf32>
    %7 = arith.maximumf %5, %6 : vector<8x128xf32>
    %c0_6 = arith.constant 0 : index
    %c0_7 = arith.constant 0 : index
    %8 = vector.load %arg4[%c0_6, %c0_7] : memref<1x128xf32, #tpu.memory_space<vmem>>, vector<1x128xf32>
    %9 = vector.broadcast %8 : vector<1x128xf32> to vector<8x128xf32>
    %10 = arith.mulf %7, %9 : vector<8x128xf32>
    %cst_8 = arith.constant dense<0.000000e+00> : vector<8xf32>
    %11 = vector.multi_reduction <add>, %10, %cst_8 [1] : vector<8x128xf32> to vector<8xf32>
    %12 = vector.shape_cast %11 : vector<8xf32> to vector<8x1xf32>
    %c0_9 = arith.constant 0 : index
    %13 = memref.load %arg5[%c0_9] : memref<1xf32, #tpu.memory_space<smem>>
    %14 = vector.broadcast %13 : f32 to vector<8x1xf32>
    %15 = arith.addf %12, %14 : vector<8x1xf32>
    %c0_10 = arith.constant 0 : index
    %c0_11 = arith.constant 0 : index
    %16 = vector.load %arg6[%c0_10, %c0_11] : memref<8x1xf32, #tpu.memory_space<vmem>>, vector<8x1xf32>
    tpu.vector_store %arg6[%c0_10, %c0_11], %15 {strides = array<i32>} : memref<8x1xf32, #tpu.memory_space<vmem>>, vector<8x1xf32>,
    return
  }
  func.func @transform_0(%arg0: i32) -> (i32, i32) {
    %c0_i32 = arith.constant 0 : i32
    %c0_i32_0 = arith.constant 0 : i32
    return %arg0, %c0_i32 : i32, i32
  }
  func.func @transform_1(%arg0: i32) -> (i32, i32) {
    %c0_i32 = arith.constant 0 : i32
    %c0_i32_0 = arith.constant 0 : i32
    %c0_i32_1 = arith.constant 0 : i32
    return %c0_i32, %c0_i32_0 : i32, i32
  }
  func.func @transform_2(%arg0: i32) -> (i32, i32) {
    %c0_i32 = arith.constant 0 : i32
    %c0_i32_0 = arith.constant 0 : i32
    %c0_i32_1 = arith.constant 0 : i32
    return %c0_i32, %c0_i32_0 : i32, i32
  }
  func.func @transform_3(%arg0: i32) -> (i32, i32) {
    %c0_i32 = arith.constant 0 : i32
    %c0_i32_0 = arith.constant 0 : i32
    %c0_i32_1 = arith.constant 0 : i32
    return %c0_i32, %c0_i32_0 : i32, i32
  }
  func.func @transform_4(%arg0: i32) -> i32 {
    %c0_i32 = arith.constant 0 : i32
    %c0_i32_0 = arith.constant 0 : i32
    return %c0_i32 : i32
  }
  func.func @transform_5(%arg0: i32) -> (i32, i32) {
    %c0_i32 = arith.constant 0 : i32
    %c0_i32_0 = arith.constant 0 : i32
    return %arg0, %c0_i32 : i32, i32
  }
}

</mosaic_0001>

<llo_original>
// kernel: tpu_custom_call.1
$region0: #{tpu_custom_call.1}
  #allocation0 [shape = 'u32[]', space=smem, size = 0x4, offset = 0x4, fixed_abs, tag = 'smem constant byte address 0x4 - core index']
  #allocation1 [shape = 'u32[144,128]{1,0:T(1,128)}', space=vmem, size = 0x12000, scoped, tag = 'internal scratch']
  #allocation2 [shape = 'f32[1]{0:T(128)S(6)}', space=smem, size = 0x200, scoped, tag = 'scoped memory for tpu_custom_call.1']
  %s0 = inlined_call_operand.hbm [shape: f32[8,32], index: 0, kind: input, shape index: {}]
  %s1 = inlined_call_operand.hbm [shape: f32[32,128], index: 1, kind: input, shape index: {}]
  %s2 = inlined_call_operand.vmem [shape: f32[1,128], index: 2, kind: input, shape index: {}]
  %s3 = inlined_call_operand.vmem [shape: f32[1,128], index: 3, kind: input, shape index: {}]
  %s4 = inlined_call_operand.<no memory space> [shape: f32[1], index: 4, kind: input, shape index: {}]
  %s5 = inlined_call_operand.vmem [shape: f32[8,1], index: 5, kind: output, shape index: {}]
  %s6 = sld [smem:[#allocation0]]
  $region38: #{tpu_custom_call.1} parent=0
    _
  %s8 = ssub.s32 1, %s6
  %s9 = scalar_select 0, %s8, %s6
  %10 = sst [smem:[#allocation2]] %s4
  $region1: #{tpu_custom_call.1} parent=0
    #allocation3 [shape = 'u8[4096]{0}', space=vmem, size = 0x1000, scoped, tag = 'input window, operand 0, single buffered']
    #allocation4 [shape = 's32[1]{0}', space=sflag, size = 0x4, scoped, tag = 'scoped memory for tpu_custom_call.1']
    #allocation5 [shape = 'u8[16384]{0}', space=vmem, size = 0x4000, scoped, tag = 'input window, operand 1, single buffered']
    #allocation6 [shape = 's32[1]{0}', space=sflag, size = 0x4, scoped, tag = 'scoped memory for tpu_custom_call.1']
    %11 = vsyncpa [#allocation4], 0
    %12 = vsyncpa [#allocation6], 0
    // Predicated region
    $region2: #{tpu_custom_call.1} parent=1 // pred_check
      _
    $region3: #{tpu_custom_call.1} parent=1 // pred_check_branch
      %14 = sbr.rel (0) target = $region5
    $region4: #{tpu_custom_call.1} parent=1 // pred_region
      %s16 = ssub.s32 128, 128
      %17 = vsyncadd [#allocation4], %s16
      %s19 = sshll.u32 [#allocation3], 4
      %s20 = int_to_ptr.vmem [resolvable:$true] %s19
      %22 = dma.hbm_to_vmem [thread:$0]  %s0, 128, %s20, [#allocation4]
    $region5: #{tpu_custom_call.1} parent=1 // pred_fallthru
      _
    // Predicated region
    $region6: #{tpu_custom_call.1} parent=1 // pred_check
      _
    $region7: #{tpu_custom_call.1} parent=1 // pred_check_branch
      %24 = sbr.rel (0) target = $region9
    $region8: #{tpu_custom_call.1} parent=1 // pred_region
      %s26 = ssub.s32 512, 512
      %27 = vsyncadd [#allocation6], %s26
      %s28 = sshll.u32 [#allocation5], 4
      %s29 = int_to_ptr.vmem [resolvable:$true] %s28
      %34 = dma.hbm_to_vmem [thread:$0]  %s1, 512, %s29, [#allocation6], 128, 128, 8
    $region9: #{tpu_custom_call.1} parent=1 // pred_fallthru
      _
    // Predicated region
    $region10: #{tpu_custom_call.1} parent=1 // pred_check
      _
    $region11: #{tpu_custom_call.1} parent=1 // pred_check_branch
      %36 = sbr.rel (0) target = $region13
    $region12: #{tpu_custom_call.1} parent=1 // pred_region
      _
    $region13: #{tpu_custom_call.1} parent=1 // pred_fallthru
      _
    // Predicated region
    $region14: #{tpu_custom_call.1} parent=1 // pred_check
      _
    $region15: #{tpu_custom_call.1} parent=1 // pred_check_branch
      %38 = sbr.rel (0) target = $region17
    $region16: #{tpu_custom_call.1} parent=1 // pred_region
      _
    $region17: #{tpu_custom_call.1} parent=1 // pred_fallthru
      _
    // Predicated region
    $region18: #{tpu_custom_call.1} parent=1 // pred_check
      _
    $region19: #{tpu_custom_call.1} parent=1 // pred_check_branch
      %40 = sbr.rel (0) target = $region21
    $region20: #{tpu_custom_call.1} parent=1 // pred_region
      _
    $region21: #{tpu_custom_call.1} parent=1 // pred_fallthru
      _
    // Predicated region
    $region22: #{tpu_custom_call.1} parent=1 // pred_check
      _
    $region23: #{tpu_custom_call.1} parent=1 // pred_check_branch
      %42 = sbr.rel (0) target = $region25
    $region24: #{tpu_custom_call.1} parent=1 // pred_region
      %43 = dma.done [#allocation4], 128
    $region25: #{tpu_custom_call.1} parent=1 // pred_fallthru
      _
    // Predicated region
    $region26: #{tpu_custom_call.1} parent=1 // pred_check
      _
    $region27: #{tpu_custom_call.1} parent=1 // pred_check_branch
      %45 = sbr.rel (0) target = $region29
    $region28: #{tpu_custom_call.1} parent=1 // pred_region
      %46 = dma.done [#allocation6], 512
    $region29: #{tpu_custom_call.1} parent=1 // pred_fallthru
      _
    %v47 = vld [vmem:[#allocation3] sm:$0xff]
    %v48 = vld [vmem:[#allocation5] sm:$0xff]
    %v49 = vld [vmem:[#allocation5 + $0x8] sm:$0xff]
    %v50 = vld [vmem:[#allocation5 + $0x10] sm:$0xff]
    %v51 = vld [vmem:[#allocation5 + $0x18] sm:$0xff]
    %v52 = vld [vmem:[%s2] sm:$0x1]
    %v54 = vlaneseq
    %v55 = vshrl.u32 %v54, 7
    %v56 = vsub.s32 0, %v55
    %v57 = vrot.slane %v52, %v56
    %vm59 = vcmask 261120
    %v61 = vsel %vm59, %v47, 0
    %63 = vmatprep.subr.mxu0 0.0
    %64 = vmatpush1.msra.mxu0 %v48
    %65 = vmatprep.subr.mxu0 0.0
    %66 = vmatpush1.msra.mxu0 %v49
    %67 = vmatprep.subr.mxu0 0.0
    %68 = vmatpush1.msra.mxu0 %v50
    %69 = vmatprep.subr.mxu0 0.0
    %70 = vmatpush1.msra.mxu0 %v51
    %71 = vmatprep.subr.mxu0 0.0
    %72 = vmatpush1.msra.mxu0 0.0
    %73 = vmatprep.subr.mxu0 0.0
    %74 = vmatpush1.msra.mxu0 0.0
    %75 = vmatprep.subr.mxu0 0.0
    %76 = vmatpush1.msra.mxu0 0.0
    %77 = vmatprep.subr.mxu0 0.0
    %78 = vmatpush1.msra.mxu0 0.0
    %79 = vmatprep.subr.mxu0 0.0
    %80 = vmatpush1.msra.mxu0 0.0
    %81 = vmatprep.subr.mxu0 0.0
    %82 = vmatpush1.msra.mxu0 0.0
    %83 = vmatprep.subr.mxu0 0.0
    %84 = vmatpush1.msra.mxu0 0.0
    %85 = vmatprep.subr.mxu0 0.0
    %86 = vmatpush1.msra.mxu0 0.0
    %87 = vmatprep.subr.mxu0 0.0
    %88 = vmatpush1.msra.mxu0 0.0
    %89 = vmatprep.subr.mxu0 0.0
    %90 = vmatpush1.msra.mxu0 0.0
    %91 = vmatprep.subr.mxu0 0.0
    %92 = vmatpush1.msra.mxu0 0.0
    %93 = vmatprep.subr.mxu0 0.0
    %94 = vmatpush1.msra.mxu0 0.0
    %95 = vmatprep.subr.mxu0 0.0
    %96 = vmatpush1.msra.mxu0 0.0
    %97 = vmatprep.subr.mxu0 0.0
    %98 = vmatpush1.msra.mxu0 0.0
    %99 = vmatprep.subr.mxu0 0.0
    %100 = vmatpush1.msra.mxu0 0.0
    %101 = vmatprep.subr.mxu0 0.0
    %102 = vmatpush1.msra.mxu0 0.0
    %103 = vmatprep.subr.mxu0 0.0
    %104 = vmatpush1.msra.mxu0 0.0
    %105 = vmatprep.subr.mxu0 0.0
    %106 = vmatpush1.msra.mxu0 0.0
    %107 = vmatprep.subr.mxu0 0.0
    %108 = vmatpush1.msra.mxu0 0.0
    %109 = vmatprep.subr.mxu0 0.0
    %110 = vmatpush1.msra.mxu0 0.0
    %111 = vmatprep.subr.mxu0 0.0
    %112 = vmatpush1.msra.mxu0 0.0
    %113 = vmatprep.subr.mxu0 0.0
    %114 = vmatpush1.msra.mxu0 0.0
    %115 = vmatprep.subr.mxu0 0.0
    %116 = vmatpush1.msra.mxu0 0.0
    %117 = vmatprep.subr.mxu0 0.0
    %118 = vmatpush1.msra.mxu0 0.0
    %119 = vmatprep.subr.mxu0 0.0
    %120 = vmatpush1.msra.mxu0 0.0
    %121 = vmatprep.subr.mxu0 0.0
    %122 = vmatpush1.msra.mxu0 0.0
    %123 = vmatprep.subr.mxu0 0.0
    %124 = vmatpush1.msra.mxu0 0.0
    %125 = vmatprep.subr.mxu0 0.0
    %126 = vmatpush1.msra.mxu0 0.0
    %127 = vmatprep.mubr.f32.mxu0 0.0
    %128 = vmatmul.mubr.f32.gmra.mrb[0].mxu0 %v61
    %v129 = vpop.f32.mrb[0].mxu0
    %v130 = vadd.f32 %v57, %v129
    %v131 = vpop.f32.mrb[0].mxu0
    %132 = vdwg.mxu0
    %v133 = vmax.f32 %v130, 0.0
    %v134 = vld [vmem:[%s3] sm:$0x1]
    %v136 = vlaneseq
    %v137 = vshrl.u32 %v136, 7
    %v138 = vsub.s32 0, %v137
    %v139 = vrot.slane %v134, %v138
    %v141 = vmul.f32 %v133, %v139
    %142 = vadd.xlane.f32.xlu0 %v141
    %v143 = vpop.xlane.xlu0 %142
    %s144 = sld [smem:[#allocation2]]
    %v145 = vstv %s144
    %v146 = vadd.f32 %v143, %v145
    %vm147 = vcmask 7168
    %148 = vst.msk [vmem:[%s5] sm:$0xff] %vm147, %v146
    // Predicated region
    $region30: #{tpu_custom_call.1} parent=1 // pred_check
      _
    $region31: #{tpu_custom_call.1} parent=1 // pred_check_branch
      %150 = sbr.rel (0) target = $region33
    $region32: #{tpu_custom_call.1} parent=1 // pred_region
      _
    $region33: #{tpu_custom_call.1} parent=1 // pred_fallthru
      _
    // Predicated region
    $region34: #{tpu_custom_call.1} parent=1 // pred_check
      _
    $region35: #{tpu_custom_call.1} parent=1 // pred_check_branch
      %152 = sbr.rel (0) target = $region37
    $region36: #{tpu_custom_call.1} parent=1 // pred_region
      _
    $region37: #{tpu_custom_call.1} parent=1 // pred_fallthru
      _
    %153 = vsyncpa [#allocation4], 1
    %154 = vsyncpa [#allocation6], 1

</llo_original>
